<compile_context>
chip_gen: v7x
topology: tpu7x:2x2x1
jax: 0.10.0
libtpu: 0.0.40
codegen_flags: <defaults>
</compile_context>

<pallas_src>
import functools

import jax
import jax.numpy as jnp
from jax.experimental import pallas as pl
from jax.experimental.pallas import tpu as pltpu


def _conv_mm_relu_kernel(p_ref, w_ref, b_ref, o_ref):
    """One grid step: o = relu(W @ P + b) for a lane-dense patch slab.

    p_ref: (K, TN)      im2col patches for TB images (K = 9*C_in, TN = TB*H*W)
    w_ref: (C_out, K)   flattened conv weights (resident across all steps)
    b_ref: (C_out, TN)  bias pre-broadcast over lanes (resident)
    o_ref: (C_out, TN)  lane-dense output slab
    """
    acc = jnp.dot(w_ref[...], p_ref[...], preferred_element_type=jnp.float32)
    o_ref[...] = jnp.maximum(acc + b_ref[...], 0.0)


def conv3x3_relu_pallas(x_nchw, weight, bias, *, tile_n_images=8):
    """Conv2d(k=3, stride=1, padding=1) + ReLU, matching PyTorch semantics.

    x_nchw : (B, C_in, H, W)     float32
    weight : (C_out, C_in, 3, 3) float32 (PyTorch OIHW layout)
    bias   : (C_out,)            float32
    returns: (B, C_out, H, W)    float32
    """
    B, C_in, H, W = x_nchw.shape
    C_out, _, KH, KW = weight.shape
    HW = H * W
    K = KH * KW * C_in
    pad = (KH - 1) // 2  # = 1

    # ---- wrapper-side im2col (XLA): lane-dense patch matrix -----------------
    x_pad = jnp.pad(x_nchw, ((0, 0), (0, 0), (pad, pad), (pad, pad)))
    taps = [
        x_pad[:, :, di:di + H, dj:dj + W].reshape(B, C_in, HW)
        for di in range(KH) for dj in range(KW)
    ]
    patches = jnp.concatenate(taps, axis=1)           # (B, K, HW)

    # Batch tiling: TB images per grid step, batch folded into the lane dim.
    # TB is capped small enough that 2x (patch slab + output slab) is well
    # under v7x's 64 MiB VMEM; at TB=8 it is < 1 MiB total.
    TB = max(1, min(tile_n_images, B))
    Bp = ((B + TB - 1) // TB) * TB
    if Bp != B:
        patches = jnp.pad(patches, ((0, Bp - B), (0, 0), (0, 0)))
    # (Bp, K, HW) -> (K, Bp*HW): patches[k, b*HW + n]
    patches = jnp.transpose(patches, (1, 0, 2)).reshape(K, Bp * HW)

    TN = TB * HW                                       # multiple of 128 (HW=256)
    grid = (Bp // TB,)

    # Weight flattened to match the tap/channel order of `patches`:
    # w_flat[o, (di*KW+dj)*C_in + ci] = weight[o, ci, di, dj]
    w_flat = jnp.transpose(weight, (0, 2, 3, 1)).reshape(C_out, K)
    # Bias pre-broadcast over lanes -> no in-kernel lane broadcast.
    b_tile = jnp.broadcast_to(bias.reshape(C_out, 1), (C_out, TN))

    flops = 2 * C_out * K * Bp * HW
    bytes_accessed = 4 * (patches.size + w_flat.size + b_tile.size
                          + C_out * Bp * HW)

    out_flat = pl.pallas_call(
        _conv_mm_relu_kernel,
        out_shape=jax.ShapeDtypeStruct((C_out, Bp * HW), jnp.float32),
        grid=grid,
        in_specs=[
            # (K, TN): K=36 equals the full array dim (exempt from the 8-rule),
            # TN is a multiple of 128 -> lane-dense DMA.
            pl.BlockSpec((K, TN), lambda i: (0, i)),
            # Weight and bias: same block every step -> stay resident in VMEM.
            pl.BlockSpec((C_out, K), lambda i: (0, 0)),
            pl.BlockSpec((C_out, TN), lambda i: (0, 0)),
        ],
        out_specs=pl.BlockSpec((C_out, TN), lambda i: (0, i)),
        compiler_params=pltpu.CompilerParams(
            dimension_semantics=("parallel",)),
        cost_estimate=pl.CostEstimate(
            flops=flops, transcendentals=0, bytes_accessed=bytes_accessed),
    )(patches, w_flat, b_tile)

    # (C_out, Bp*HW) -> (C_out, B, H, W) -> (B, C_out, H, W)
    out = out_flat.reshape(C_out, Bp, H, W)[:, :B]
    return jnp.transpose(out, (1, 0, 2, 3))


def reference_conv3x3_relu(x_nchw, weight, bias):
    """Pure-JAX reference (lax conv) for correctness checking."""
    out = jax.lax.conv_general_dilated(
        x_nchw, weight, window_strides=(1, 1), padding=((1, 1), (1, 1)),
        dimension_numbers=("NCHW", "OIHW", "NCHW"))
    out = out + bias.reshape(1, -1, 1, 1)
    return jnp.maximum(out, 0.0)


class ModelPartPallas:
    """Generic wrapper mirroring `ModelPart`: forward delegates to `part`."""

    def __init__(self, part):
        self.part = part

    def __call__(self, x):
        return self.part(x)


if __name__ == "__main__":
    key = jax.random.PRNGKey(0)
    k_x, k_w, k_b = jax.random.split(key, 3)

    B, C_in, H, W = 2, 4, 16, 16
    C_out = 8

    x = jax.random.normal(k_x, (B, C_in, H, W), dtype=jnp.float32)
    weight = jax.random.normal(k_w, (C_out, C_in, 3, 3), dtype=jnp.float32) * 0.1
    bias = jax.random.normal(k_b, (C_out,), dtype=jnp.float32) * 0.1

    part = jax.jit(functools.partial(conv3x3_relu_pallas, weight=weight, bias=bias))
    model = ModelPartPallas(part)

    out = model(x)
    out = jax.block_until_ready(out)

    # Sanity check against pure-JAX reference.
    ref = jax.block_until_ready(reference_conv3x3_relu(x, weight, bias))
    assert out.shape == (B, C_out, H, W)
    assert jnp.allclose(out, ref, atol=1e-4, rtol=1e-4)

    print("KERNEL_OK")
</pallas_src>

<mosaic_0001>
module attributes {stable_mosaic.version = 11 : i64} {
  func.func @_conv_mm_relu_kernel(%arg0: i32, %arg1: memref<36x512xf32, #tpu.memory_space<vmem>>, %arg2: memref<8x36xf32, #tpu.memory_space<vmem>>, %arg3: memref<8x512xf32, #tpu.memory_space<vmem>>, %arg4: memref<8x512xf32, #tpu.memory_space<vmem>>) attributes {dimension_semantics = [#tpu.dimension_semantics<parallel>], iteration_bounds = array<i64: 1>, scalar_prefetch = 0 : i64, scratch_operands = 0 : i64, tpu.core_type = #tpu.core_type<tc>, window_params = [{transform_indices = @transform_0, window_bounds = array<i64: 36, 512>}, {pipeline_mode = #tpu.pipeline_mode<synchronous>, transform_indices = @transform_1, window_bounds = array<i64: 8, 36>}, {pipeline_mode = #tpu.pipeline_mode<synchronous>, transform_indices = @transform_2, window_bounds = array<i64: 8, 512>}, {transform_indices = @transform_3, window_bounds = array<i64: 8, 512>}]} {
    %c0 = arith.constant 0 : index
    %c0_0 = arith.constant 0 : index
    %0 = vector.load %arg2[%c0, %c0_0] : memref<8x36xf32, #tpu.memory_space<vmem>>, vector<8x36xf32>
    %c0_1 = arith.constant 0 : index
    %c0_2 = arith.constant 0 : index
    %1 = vector.load %arg1[%c0_1, %c0_2] : memref<36x512xf32, #tpu.memory_space<vmem>>, vector<36x512xf32>
    %cst = arith.constant dense<0.000000e+00> : vector<8x512xf32>
    %2 = tpu.matmul %0, %1, %cst {dimension_numbers = #tpu.dot_dimension_numbers<[1], [0], [0], [1], [0, 0, 1, 1], [], []>} : vector<8x36xf32>, vector<36x512xf32>, vector<8x512xf32> -> vector<8x512xf32>
    %c0_3 = arith.constant 0 : index
    %c0_4 = arith.constant 0 : index
    %3 = vector.load %arg3[%c0_3, %c0_4] : memref<8x512xf32, #tpu.memory_space<vmem>>, vector<8x512xf32>
    %4 = arith.addf %2, %3 : vector<8x512xf32>
    %cst_5 = arith.constant 0.000000e+00 : f32
    %5 = vector.broadcast %cst_5 : f32 to vector<8x512xf32>
    %6 = arith.maximumf %4, %5 : vector<8x512xf32>
    %c0_6 = arith.constant 0 : index
    %c0_7 = arith.constant 0 : index
    %7 = vector.load %arg4[%c0_6, %c0_7] : memref<8x512xf32, #tpu.memory_space<vmem>>, vector<8x512xf32>
    tpu.vector_store %arg4[%c0_6, %c0_7], %6 {strides = array<i32>} : memref<8x512xf32, #tpu.memory_space<vmem>>, vector<8x512xf32>,
    return
  }
  func.func @transform_0(%arg0: i32) -> (i32, i32) {
    %c0_i32 = arith.constant 0 : i32
    %c0_i32_0 = arith.constant 0 : i32
    return %c0_i32, %arg0 : i32, i32
  }
  func.func @transform_1(%arg0: i32) -> (i32, i32) {
    %c0_i32 = arith.constant 0 : i32
    %c0_i32_0 = arith.constant 0 : i32
    %c0_i32_1 = arith.constant 0 : i32
    return %c0_i32, %c0_i32_0 : i32, i32
  }
  func.func @transform_2(%arg0: i32) -> (i32, i32) {
    %c0_i32 = arith.constant 0 : i32
    %c0_i32_0 = arith.constant 0 : i32
    %c0_i32_1 = arith.constant 0 : i32
    return %c0_i32, %c0_i32_0 : i32, i32
  }
  func.func @transform_3(%arg0: i32) -> (i32, i32) {
    %c0_i32 = arith.constant 0 : i32
    %c0_i32_0 = arith.constant 0 : i32
    return %c0_i32, %arg0 : i32, i32
  }
}

</mosaic_0001>

<llo_original>
// kernel: conv3x3_relu_pallas.1
$region0: #{conv3x3_relu_pallas.1}
  #allocation0 [shape = 'u32[]', space=smem, size = 0x4, offset = 0x4, fixed_abs, tag = 'smem constant byte address 0x4 - core index']
  #allocation1 [shape = 'u32[144,128]{1,0:T(1,128)}', space=vmem, size = 0x12000, scoped, tag = 'internal scratch']
  %s0 = inlined_call_operand.vmem [shape: f32[36,512], index: 0, kind: input, shape index: {}]
  %s1 = inlined_call_operand.vmem [shape: f32[8,36], index: 1, kind: input, shape index: {}]
  %s2 = inlined_call_operand.vmem [shape: f32[8,512], index: 2, kind: input, shape index: {}]
  %s3 = inlined_call_operand.vmem [shape: f32[8,512], index: 3, kind: output, shape index: {}]
  %s4 = sld [smem:[#allocation0]]
  $region22: #{conv3x3_relu_pallas.1} parent=0
    _
  %s6 = ssub.s32 1, %s4
  %s7 = scalar_select 0, %s6, %s4
  // Predicated region
  $region2: #{conv3x3_relu_pallas.1} parent=0 // pred_check
    _
  $region3: #{conv3x3_relu_pallas.1} parent=0 // pred_check_branch
    %9 = sbr.rel (0) target = $region5
  $region4: #{conv3x3_relu_pallas.1} parent=0 // pred_region
    _
  $region5: #{conv3x3_relu_pallas.1} parent=0 // pred_fallthru
    _
  // Predicated region
  $region6: #{conv3x3_relu_pallas.1} parent=0 // pred_check
    _
  $region7: #{conv3x3_relu_pallas.1} parent=0 // pred_check_branch
    %11 = sbr.rel (0) target = $region9
  $region8: #{conv3x3_relu_pallas.1} parent=0 // pred_region
    _
  $region9: #{conv3x3_relu_pallas.1} parent=0 // pred_fallthru
    _
  // Predicated region
  $region10: #{conv3x3_relu_pallas.1} parent=0 // pred_check
    _
  $region11: #{conv3x3_relu_pallas.1} parent=0 // pred_check_branch
    %13 = sbr.rel (0) target = $region13
  $region12: #{conv3x3_relu_pallas.1} parent=0 // pred_region
    _
  $region13: #{conv3x3_relu_pallas.1} parent=0 // pred_fallthru
    _
  %v14 = vld [vmem:[%s1] sm:$0xff]
  %v15 = vld [vmem:[%s0] sm:$0xff]
  %v16 = vld [vmem:[%s0 + $0x8] sm:$0xff]
  %v17 = vld [vmem:[%s0 + $0x10] sm:$0xff]
  %v18 = vld [vmem:[%s0 + $0x18] sm:$0xff]
  %v19 = vld [vmem:[%s0 + $0x20] sm:$0xff]
  %v20 = vld [vmem:[%s0 + $0x28] sm:$0xff]
  %v21 = vld [vmem:[%s0 + $0x30] sm:$0xff]
  %v22 = vld [vmem:[%s0 + $0x38] sm:$0xff]
  %v23 = vld [vmem:[%s0 + $0x40] sm:$0xff]
  %v24 = vld [vmem:[%s0 + $0x48] sm:$0xff]
  %v25 = vld [vmem:[%s0 + $0x50] sm:$0xff]
  %v26 = vld [vmem:[%s0 + $0x58] sm:$0xff]
  %v27 = vld [vmem:[%s0 + $0x60] sm:$0xff]
  %v28 = vld [vmem:[%s0 + $0x68] sm:$0xff]
  %v29 = vld [vmem:[%s0 + $0x70] sm:$0xff]
  %v30 = vld [vmem:[%s0 + $0x78] sm:$0xff]
  %v31 = vld [vmem:[%s0 + $0x80] sm:$0xf]
  %v32 = vld [vmem:[%s0 + $0x88] sm:$0xf]
  %v33 = vld [vmem:[%s0 + $0x90] sm:$0xf]
  %v34 = vld [vmem:[%s0 + $0x98] sm:$0xf]
  %v35 = vld [vmem:[%s2] sm:$0xff]
  %v36 = vld [vmem:[%s2 + $0x8] sm:$0xff]
  %v37 = vld [vmem:[%s2 + $0x10] sm:$0xff]
  %v38 = vld [vmem:[%s2 + $0x18] sm:$0xff]
  %vm39 = vcmask 293888
  %v41 = vsel %vm39, %v14, 0
  %vm43 = vcmask 1043456
  %v45 = vsel %vm43, %v31, 0
  %v48 = vsel %vm43, %v32, 0
  %v51 = vsel %vm43, %v33, 0
  %v54 = vsel %vm43, %v34, 0
  %56 = vmatprep.subr.mxu0 %v16
  %57 = vmatpush1.msra.mxu0 %v15
  %58 = vmatprep.subr.mxu0 %v20
  %59 = vmatpush1.msra.mxu0 %v19
  %60 = vmatprep.subr.mxu0 %v24
  %61 = vmatpush1.msra.mxu0 %v23
  %62 = vmatprep.subr.mxu0 %v28
  %63 = vmatpush1.msra.mxu0 %v27
  %64 = vmatprep.subr.mxu0 %v48
  %65 = vmatpush1.msra.mxu0 %v45
  %66 = vmatprep.subr.mxu0 0.0
  %67 = vmatpush1.msra.mxu0 0.0
  %68 = vmatprep.subr.mxu0 0.0
  %69 = vmatpush1.msra.mxu0 0.0
  %70 = vmatprep.subr.mxu0 0.0
  %71 = vmatpush1.msra.mxu0 0.0
  %72 = vmatprep.subr.mxu0 0.0
  %73 = vmatpush1.msra.mxu0 0.0
  %74 = vmatprep.subr.mxu0 0.0
  %75 = vmatpush1.msra.mxu0 0.0
  %76 = vmatprep.subr.mxu0 0.0
  %77 = vmatpush1.msra.mxu0 0.0
  %78 = vmatprep.subr.mxu0 0.0
  %79 = vmatpush1.msra.mxu0 0.0
  %80 = vmatprep.subr.mxu0 0.0
  %81 = vmatpush1.msra.mxu0 0.0
  %82 = vmatprep.subr.mxu0 0.0
  %83 = vmatpush1.msra.mxu0 0.0
  %84 = vmatprep.subr.mxu0 0.0
  %85 = vmatpush1.msra.mxu0 0.0
  %86 = vmatprep.subr.mxu0 0.0
  %87 = vmatpush1.msra.mxu0 0.0
  %88 = vmatprep.subr.mxu0 0.0
  %89 = vmatpush1.msra.mxu0 0.0
  %90 = vmatprep.subr.mxu0 0.0
  %91 = vmatpush1.msra.mxu0 0.0
  %92 = vmatprep.subr.mxu0 0.0
  %93 = vmatpush1.msra.mxu0 0.0
  %94 = vmatprep.subr.mxu0 0.0
  %95 = vmatpush1.msra.mxu0 0.0
  %96 = vmatprep.subr.mxu0 0.0
  %97 = vmatpush1.msra.mxu0 0.0
  %98 = vmatprep.subr.mxu0 0.0
  %99 = vmatpush1.msra.mxu0 0.0
  %100 = vmatprep.subr.mxu0 0.0
  %101 = vmatpush1.msra.mxu0 0.0
  %102 = vmatprep.subr.mxu0 0.0
  %103 = vmatpush1.msra.mxu0 0.0
  %104 = vmatprep.subr.mxu0 0.0
  %105 = vmatpush1.msra.mxu0 0.0
  %106 = vmatprep.subr.mxu0 0.0
  %107 = vmatpush1.msra.mxu0 0.0
  %108 = vmatprep.subr.mxu0 0.0
  %109 = vmatpush1.msra.mxu0 0.0
  %110 = vmatprep.subr.mxu0 0.0
  %111 = vmatpush1.msra.mxu0 0.0
  %112 = vmatprep.subr.mxu0 0.0
  %113 = vmatpush1.msra.mxu0 0.0
  %114 = vmatprep.subr.mxu0 0.0
  %115 = vmatpush1.msra.mxu0 0.0
  %116 = vmatprep.subr.mxu0 0.0
  %117 = vmatpush1.msra.mxu0 0.0
  %118 = vmatprep.subr.mxu0 0.0
  %119 = vmatpush1.msra.mxu0 0.0
  %120 = vmatprep.mubr.f32.mxu0 0.0
  %121 = vmatmul.mubr.f32.gmra.mrb[0].mxu0 %v41
  %v122 = vpop.f32.mrb[0].mxu0
  %v123 = vadd.f32 %v35, %v122
  %v124 = vpop.f32.mrb[0].mxu0
  %v125 = vadd.f32 %v36, %v124
  %126 = vdwg.mxu0
  %127 = vmatprep.subr.mxu0 %v18
  %128 = vmatpush1.msra.mxu0 %v17
  %129 = vmatprep.subr.mxu0 %v22
  %130 = vmatpush1.msra.mxu0 %v21
  %131 = vmatprep.subr.mxu0 %v26
  %132 = vmatpush1.msra.mxu0 %v25
  %133 = vmatprep.subr.mxu0 %v30
  %134 = vmatpush1.msra.mxu0 %v29
  %135 = vmatprep.subr.mxu0 %v54
  %136 = vmatpush1.msra.mxu0 %v51
  %137 = vmatprep.subr.mxu0 0.0
  %138 = vmatpush1.msra.mxu0 0.0
  %139 = vmatprep.subr.mxu0 0.0
  %140 = vmatpush1.msra.mxu0 0.0
  %141 = vmatprep.subr.mxu0 0.0
  %142 = vmatpush1.msra.mxu0 0.0
  %143 = vmatprep.subr.mxu0 0.0
  %144 = vmatpush1.msra.mxu0 0.0
  %145 = vmatprep.subr.mxu0 0.0
  %146 = vmatpush1.msra.mxu0 0.0
  %147 = vmatprep.subr.mxu0 0.0
  %148 = vmatpush1.msra.mxu0 0.0
  %149 = vmatprep.subr.mxu0 0.0
  %150 = vmatpush1.msra.mxu0 0.0
  %151 = vmatprep.subr.mxu0 0.0
  %152 = vmatpush1.msra.mxu0 0.0
  %153 = vmatprep.subr.mxu0 0.0
  %154 = vmatpush1.msra.mxu0 0.0
  %155 = vmatprep.subr.mxu0 0.0
  %156 = vmatpush1.msra.mxu0 0.0
  %157 = vmatprep.subr.mxu0 0.0
  %158 = vmatpush1.msra.mxu0 0.0
  %159 = vmatprep.subr.mxu0 0.0
  %160 = vmatpush1.msra.mxu0 0.0
  %161 = vmatprep.subr.mxu0 0.0
  %162 = vmatpush1.msra.mxu0 0.0
  %163 = vmatprep.subr.mxu0 0.0
  %164 = vmatpush1.msra.mxu0 0.0
  %165 = vmatprep.subr.mxu0 0.0
  %166 = vmatpush1.msra.mxu0 0.0
  %167 = vmatprep.subr.mxu0 0.0
  %168 = vmatpush1.msra.mxu0 0.0
  %169 = vmatprep.subr.mxu0 0.0
  %170 = vmatpush1.msra.mxu0 0.0
  %171 = vmatprep.subr.mxu0 0.0
  %172 = vmatpush1.msra.mxu0 0.0
  %173 = vmatprep.subr.mxu0 0.0
  %174 = vmatpush1.msra.mxu0 0.0
  %175 = vmatprep.subr.mxu0 0.0
  %176 = vmatpush1.msra.mxu0 0.0
  %177 = vmatprep.subr.mxu0 0.0
  %178 = vmatpush1.msra.mxu0 0.0
  %179 = vmatprep.subr.mxu0 0.0
  %180 = vmatpush1.msra.mxu0 0.0
  %181 = vmatprep.subr.mxu0 0.0
  %182 = vmatpush1.msra.mxu0 0.0
  %183 = vmatprep.subr.mxu0 0.0
  %184 = vmatpush1.msra.mxu0 0.0
  %185 = vmatprep.subr.mxu0 0.0
  %186 = vmatpush1.msra.mxu0 0.0
  %187 = vmatprep.subr.mxu0 0.0
  %188 = vmatpush1.msra.mxu0 0.0
  %189 = vmatprep.subr.mxu0 0.0
  %190 = vmatpush1.msra.mxu0 0.0
  %191 = vmatprep.mubr.f32.mxu0 0.0
  %192 = vmatmul.mubr.f32.gmra.mrb[0].mxu0 %v41
  %v193 = vpop.f32.mrb[0].mxu0
  %v194 = vadd.f32 %v37, %v193
  %v195 = vpop.f32.mrb[0].mxu0
  %v196 = vadd.f32 %v38, %v195
  %197 = vdwg.mxu0
  %v198 = vmax.f32 %v123, 0.0
  %v199 = vmax.f32 %v125, 0.0
  %v200 = vmax.f32 %v194, 0.0
  %v201 = vmax.f32 %v196, 0.0
  %202 = vst [vmem:[%s3] sm:$0xff] %v198
  %203 = vst [vmem:[%s3 + $0x8] sm:$0xff] %v199
  %204 = vst [vmem:[%s3 + $0x10] sm:$0xff] %v200
  %205 = vst [vmem:[%s3 + $0x18] sm:$0xff] %v201
  // Predicated region
  $region14: #{conv3x3_relu_pallas.1} parent=0 // pred_check
    _
  $region15: #{conv3x3_relu_pallas.1} parent=0 // pred_check_branch
    %207 = sbr.rel (0) target = $region17
  $region16: #{conv3x3_relu_pallas.1} parent=0 // pred_region
    _
  $region17: #{conv3x3_relu_pallas.1} parent=0 // pred_fallthru
    _
  // Predicated region
  $region18: #{conv3x3_relu_pallas.1} parent=0 // pred_check
    _
  $region19: #{conv3x3_relu_pallas.1} parent=0 // pred_check_branch
    %209 = sbr.rel (0) target = $region21
  $region20: #{conv3x3_relu_pallas.1} parent=0 // pred_region
    _
  $region21: #{conv3x3_relu_pallas.1} parent=0 // pred_fallthru
    _

</llo_original>
